<compile_context>
chip_gen: v5e
topology: v5e:2x2
jax: 0.10.0
libtpu: 0.0.40
codegen_flags: <defaults>
</compile_context>

<pallas_src>
import functools

import numpy as np
import jax
import jax.numpy as jnp
from jax.experimental import pallas as pl
from jax.experimental.pallas import tpu as pltpu


# ----------------------------------------------------------------------------
# small helpers
# ----------------------------------------------------------------------------
def _round_up(x, m):
    return ((x + m - 1) // m) * m


def _pad_to(a, shape):
    pads = [(0, s - d) for d, s in zip(a.shape, shape)]
    return jnp.pad(a, pads)


def _pad_gate_axis(a, h, hp):
    """Pad the last axis (4*h) of `a` to 4*hp, padding each gate block."""
    lead = a.shape[:-1]
    a4 = a.reshape(lead + (4, h))
    a4 = jnp.pad(a4, [(0, 0)] * len(lead) + [(0, 0), (0, hp - h)])
    return a4.reshape(lead + (4 * hp,))


# ----------------------------------------------------------------------------
# Shared tiled matmul + bias kernel: (M,K)@(K,N) + b, bf16 MXU operands,
# f32 accumulation.  Used for the hoisted LSTM input projection and the vocab
# projection.  grid axes (M,N) are "parallel" -> both TensorCores on v7x.
# ----------------------------------------------------------------------------
def _matmul_bias_kernel(x_ref, w_ref, b_ref, o_ref, acc_ref):
    @pl.when(pl.program_id(2) == 0)
    def _():
        acc_ref[...] = jnp.zeros_like(acc_ref)

    acc_ref[...] += jnp.dot(x_ref[...].astype(jnp.bfloat16),
                            w_ref[...].astype(jnp.bfloat16),
                            preferred_element_type=jnp.float32)

    @pl.when(pl.program_id(2) == pl.num_programs(2) - 1)
    def _():
        o_ref[...] = (acc_ref[...] + b_ref[...]).astype(o_ref.dtype)


def matmul_bias(x2d, w_t, b, out_dtype=jnp.float32):
    """x2d: (M,K); w_t: (K,N); b: (1,N) or (N,). Returns (M,N) out_dtype."""
    M, K = x2d.shape
    N = w_t.shape[1]
    # Large lane-dense output tiles (amortize grid-step overhead, unmasked vst)
    # while keeping the double-buffered tile set well under v5e's 16 MiB scoped
    # VMEM default: tm=256, tn=1024, tk = full K up to 1024.
    tm = min(256, _round_up(M, 8))
    tn = min(1024, _round_up(N, 128))
    tk = _round_up(K, 128) if K <= 1024 else 512
    Mp, Kp, Np = _round_up(M, tm), _round_up(K, tk), _round_up(N, tn)

    xp = _pad_to(x2d, (Mp, Kp))
    wp = _pad_to(w_t, (Kp, Np))
    bp = _pad_to(b.reshape(1, -1).astype(jnp.float32), (1, Np))

    out = pl.pallas_call(
        _matmul_bias_kernel,
        out_shape=jax.ShapeDtypeStruct((Mp, Np), out_dtype),
        grid_spec=pltpu.PrefetchScalarGridSpec(
            num_scalar_prefetch=0,
            grid=(Mp // tm, Np // tn, Kp // tk),
            in_specs=[pl.BlockSpec((tm, tk), lambda i, j, k: (i, k)),
                      pl.BlockSpec((tk, tn), lambda i, j, k: (k, j)),
                      pl.BlockSpec((1, tn), lambda i, j, k: (0, j))],
            out_specs=pl.BlockSpec((tm, tn), lambda i, j, k: (i, j)),
            scratch_shapes=[pltpu.VMEM((tm, tn), jnp.float32)]),
        compiler_params=pltpu.CompilerParams(
            dimension_semantics=("parallel", "parallel", "arbitrary")),
    )(xp, wp, bp)
    return out[:M, :N]


# ----------------------------------------------------------------------------
# LSTM recurrence kernel.  Consumes precomputed gate pre-activations
# gx = x @ W_ih^T + (b_ih + b_hh) and only does h @ W_hh^T + gate math per
# timestep.  grid = (num_chunks,), "arbitrary"; h/c carried in VMEM scratch.
# PyTorch gate order: i, f, g, o.
# ----------------------------------------------------------------------------
def _lstm_recurrence_kernel(gx_ref, whh_ref, h0_ref, c0_ref,
                            y_ref, hn_ref, cn_ref,
                            h_scr, c_scr, *, seq_len, chunk, tail_pad, unroll):
    cidx = pl.program_id(0)
    last = pl.num_programs(0) - 1

    @pl.when(cidx == 0)
    def _():
        h_scr[...] = h0_ref[...]
        c_scr[...] = c0_ref[...]

    Bp, Hp = h_scr.shape

    def make_step(masked):
        def step(t, carry):
            h, c = carry
            row = pl.multiple_of(t * Bp, Bp)
            # h carry stays f32; cast only the MXU operand to bf16 (f32 acc).
            gates = (gx_ref[pl.ds(row, Bp), :]
                     + jnp.dot(h.astype(jnp.bfloat16), whh_ref[...],
                               preferred_element_type=jnp.float32))
            i = jax.nn.sigmoid(gates[:, 0 * Hp:1 * Hp])
            f = jax.nn.sigmoid(gates[:, 1 * Hp:2 * Hp])
            g = jnp.tanh(gates[:, 2 * Hp:3 * Hp])
            o = jax.nn.sigmoid(gates[:, 3 * Hp:4 * Hp])
            c_new = f * c + i * g
            h_new = o * jnp.tanh(c_new)
            if masked:
                # Only emitted for the tail chunk: keep (h, c) frozen on padded
                # timesteps so the final state is the real one.
                valid = (cidx * chunk + t) < seq_len
                h_new = jnp.where(valid, h_new, h)
                c_new = jnp.where(valid, c_new, c)
            y_ref[pl.ds(row, Bp), :] = h_new.astype(y_ref.dtype)
            return h_new, c_new
        return step

    def run(masked):
        return jax.lax.fori_loop(0, chunk, make_step(masked),
                                 (h_scr[...], c_scr[...]), unroll=unroll)

    if tail_pad == 0:
        h_fin, c_fin = run(False)
        h_scr[...] = h_fin
        c_scr[...] = c_fin
    else:
        @pl.when(cidx != last)
        def _():
            h_fin, c_fin = run(False)
            h_scr[...] = h_fin
            c_scr[...] = c_fin

        @pl.when(cidx == last)
        def _():
            h_fin, c_fin = run(True)
            h_scr[...] = h_fin
            c_scr[...] = c_fin

    @pl.when(cidx == last)
    def _():
        hn_ref[...] = h_scr[...].astype(hn_ref.dtype)
        cn_ref[...] = c_scr[...].astype(cn_ref.dtype)


def lstm_recurrence(gx, w_hh_t, h0, c0, *, seq_len, chunk,
                    y_dtype=jnp.bfloat16):
    """gx: (Tp*Bp, 4Hp) f32; w_hh_t: (Hp, 4Hp) bf16; h0/c0: (Bp, Hp) f32.
    Returns (y_slab (Tp*Bp, Hp) y_dtype, h_n (Bp,Hp) f32, c_n (Bp,Hp) f32)."""
    M, _ = gx.shape
    Bp, Hp = h0.shape
    Tp = M // Bp
    num_chunks = Tp // chunk
    tail_pad = Tp - seq_len
    unroll = max(1, min(4, chunk))

    kernel = functools.partial(_lstm_recurrence_kernel, seq_len=seq_len,
                               chunk=chunk, tail_pad=tail_pad, unroll=unroll)
    out_shapes = (
        jax.ShapeDtypeStruct((M, Hp), y_dtype),         # hidden sequence slab
        jax.ShapeDtypeStruct((Bp, Hp), jnp.float32),    # final h
        jax.ShapeDtypeStruct((Bp, Hp), jnp.float32),    # final c
    )
    grid_spec = pltpu.PrefetchScalarGridSpec(
        num_scalar_prefetch=0,
        grid=(num_chunks,),
        in_specs=[
            pl.BlockSpec((chunk * Bp, 4 * Hp), lambda c: (c, 0)),   # gx chunk
            pl.BlockSpec((Hp, 4 * Hp), lambda c: (0, 0)),           # W_hh^T
            pl.BlockSpec((Bp, Hp), lambda c: (0, 0)),               # h0
            pl.BlockSpec((Bp, Hp), lambda c: (0, 0)),               # c0
        ],
        out_specs=[
            pl.BlockSpec((chunk * Bp, Hp), lambda c: (c, 0)),       # y chunk
            pl.BlockSpec((Bp, Hp), lambda c: (0, 0)),               # h_n
            pl.BlockSpec((Bp, Hp), lambda c: (0, 0)),               # c_n
        ],
        scratch_shapes=[
            pltpu.VMEM((Bp, Hp), jnp.float32),                      # h carry
            pltpu.VMEM((Bp, Hp), jnp.float32),                      # c carry
        ],
    )

    # VMEM estimate (double-buffered gx/y chunks + W_hh + states + scratch).
    y_isz = np.dtype(y_dtype).itemsize
    w_isz = np.dtype(w_hh_t.dtype).itemsize
    est = (2 * (chunk * Bp * 4 * Hp * 4 + chunk * Bp * Hp * y_isz
                + Hp * 4 * Hp * w_isz + 4 * Bp * Hp * 4)
           + 2 * Bp * Hp * 4)
    cp_kwargs = dict(dimension_semantics=("arbitrary",))
    if est > 12 * 1024 * 1024:   # only override the scoped default when needed
        cp_kwargs["vmem_limit_bytes"] = min(int(est * 1.3) + (2 << 20), 96 << 20)

    return pl.pallas_call(
        kernel,
        out_shape=out_shapes,
        grid_spec=grid_spec,
        compiler_params=pltpu.CompilerParams(**cp_kwargs),
    )(gx, w_hh_t, h0, c0)


def _pick_chunk(T, Bp, Hp, budget_bytes=8 << 20):
    """Time-chunk so double-buffered gx(f32)+y(bf16) chunks fit the budget."""
    per_step = Bp * (4 * Hp * 4 + Hp * 2) * 2
    return int(max(1, min(T, 128, budget_bytes // max(per_step, 1))))


# ----------------------------------------------------------------------------
# Parameters (deterministic, mimicking init_weights: U(-0.05, 0.05))
# ----------------------------------------------------------------------------
def init_params(key, vocab_size, embed_dim, hidden_dim, num_layers):
    def u(k, shape):
        return jax.random.uniform(k, shape, jnp.float32, -0.05, 0.05)

    keys = jax.random.split(key, 3 + 4 * num_layers)
    params = {
        "embedding": u(keys[0], (vocab_size, embed_dim)),
        "w_out_t": u(keys[1], (hidden_dim, vocab_size)),   # Linear weight^T
        "b_out": u(keys[2], (1, vocab_size)),
        "lstm": [],
    }
    for l in range(num_layers):
        in_dim = embed_dim if l == 0 else hidden_dim
        k0, k1, k2, k3 = keys[3 + 4 * l: 7 + 4 * l]
        # stored pre-transposed: (in_dim, 4H) and (H, 4H); gate order i,f,g,o
        params["lstm"].append({
            "w_ih_t": u(k0, (in_dim, 4 * hidden_dim)),
            "w_hh_t": u(k1, (hidden_dim, 4 * hidden_dim)),
            # b_ih + b_hh collapsed into one bias row
            "bias": u(k2, (1, 4 * hidden_dim)) + u(k3, (1, 4 * hidden_dim)),
        })
    return params


# ----------------------------------------------------------------------------
# Forward: embedding gather (glue) -> per layer [parallel input projection ->
# serial recurrence] -> row-compaction -> tiled vocab projection.
# ----------------------------------------------------------------------------
def seq2seq_forward(params, x_tok, hx, *, chunk_t=None):
    h0, c0 = hx                                      # each (L, B, H)
    L, B, H = h0.shape
    T = int(x_tok.shape[0])
    E = params["embedding"].shape[1]
    V = params["w_out_t"].shape[1]

    # B padded to 16 so bf16 slabs keep (16,128)-friendly sublane packing.
    Bp = _round_up(B, 16)
    Hp = _round_up(H, 128)
    Ep = _round_up(E, 128)
    Tc = chunk_t if chunk_t is not None else _pick_chunk(T, Bp, Hp)
    Tc = max(1, min(Tc, T))
    Tp = _round_up(T, Tc)

    # Embedding gather kept as JAX glue (see TODO at top of file); the slab is
    # stored bf16 since it only feeds bf16 MXU operands downstream.
    emb = jnp.take(params["embedding"], x_tok, axis=0)        # (T, B, E)
    slab = _pad_to(emb, (Tp, Bp, Ep)).reshape(Tp * Bp, Ep).astype(jnp.bfloat16)

    h0p = _pad_to(h0, (L, Bp, Hp))
    c0p = _pad_to(c0, (L, Bp, Hp))

    # NOTE: padded batch rows do NOT stay zero through the recurrence (their
    # gates equal the bias), but batch rows never mix and are sliced off below.
    # Padded hidden LANES do stay exactly 0 (zero-padded weights/bias/h0/c0).
    h_n, c_n = [], []
    for l, lw in enumerate(params["lstm"]):
        in_p = Ep if l == 0 else Hp
        w_ih = _pad_to(_pad_gate_axis(lw["w_ih_t"], H, Hp),
                       (in_p, 4 * Hp)).astype(jnp.bfloat16)
        w_hh = _pad_to(_pad_gate_axis(lw["w_hh_t"], H, Hp),
                       (Hp, 4 * Hp)).astype(jnp.bfloat16)
        bias = _pad_gate_axis(lw["bias"], H, Hp)              # (1, 4Hp) f32

        # (1) Hoisted input projection for ALL timesteps: parallel tiled matmul
        #     (both TensorCores on v7x), f32 gate pre-activations.
        gx = matmul_bias(slab, w_ih, bias, out_dtype=jnp.float32)  # (Tp*Bp,4Hp)

        # (2) Serial recurrence over time chunks (single "arbitrary" grid axis).
        slab, h_l, c_l = lstm_recurrence(gx, w_hh, h0p[l], c0p[l],
                                         seq_len=T, chunk=Tc,
                                         y_dtype=jnp.bfloat16)
        h_n.append(h_l[:B, :H])
        c_n.append(c_l[:B, :H])

    # Compact to the T*B real (t,b) rows before the FLOP-dominant vocab
    # projection so no padded batch/time rows are projected.
    hidden = slab.reshape(Tp, Bp, Hp)[:T, :B, :].reshape(T * B, Hp)
    w_out = _pad_to(params["w_out_t"], (Hp, V)).astype(jnp.bfloat16)
    logits2d = matmul_bias(hidden, w_out, params["b_out"],
                           out_dtype=jnp.float32)             # (T*B, V)
    logits = logits2d.reshape(T, B, V)
    return logits, (jnp.stack(h_n), jnp.stack(c_n))


# ----------------------------------------------------------------------------
# Pure-JAX f32 reference (same math, unpadded) for a correctness check.
# ----------------------------------------------------------------------------
def seq2seq_ref(params, x_tok, hx):
    h0, c0 = hx
    out = jnp.take(params["embedding"], x_tok, axis=0)
    h_n, c_n = [], []
    for l, lw in enumerate(params["lstm"]):
        H = h0.shape[-1]
        h, c = h0[l], c0[l]
        ys = []
        for t in range(out.shape[0]):
            gates = out[t] @ lw["w_ih_t"] + h @ lw["w_hh_t"] + lw["bias"]
            i = jax.nn.sigmoid(gates[:, 0 * H:1 * H])
            f = jax.nn.sigmoid(gates[:, 1 * H:2 * H])
            g = jnp.tanh(gates[:, 2 * H:3 * H])
            o = jax.nn.sigmoid(gates[:, 3 * H:4 * H])
            c = f * c + i * g
            h = o * jnp.tanh(c)
            ys.append(h)
        out = jnp.stack(ys)
        h_n.append(h)
        c_n.append(c)
    logits = out @ params["w_out_t"] + params["b_out"][0]
    return logits, (jnp.stack(h_n), jnp.stack(c_n))


if __name__ == "__main__":
    vocab_size, embed_dim, hidden_dim, num_layers = 50, 32, 32, 2
    T, B = 8, 2

    key = jax.random.PRNGKey(0)
    k_par, k_tok, k_h, k_c = jax.random.split(key, 4)

    params = init_params(k_par, vocab_size, embed_dim, hidden_dim, num_layers)
    x_tok = jax.random.randint(k_tok, (T, B), 0, vocab_size, dtype=jnp.int32)
    h0 = jax.random.uniform(k_h, (num_layers, B, hidden_dim), jnp.float32,
                            -0.1, 0.1)
    c0 = jax.random.uniform(k_c, (num_layers, B, hidden_dim), jnp.float32,
                            -0.1, 0.1)

    logits, (h_n, c_n) = seq2seq_forward(params, x_tok, (h0, c0))
    jax.block_until_ready((logits, h_n, c_n))

    ref_logits, (ref_h, ref_c) = seq2seq_ref(params, x_tok, (h0, c0))
    assert logits.shape == (T, B, vocab_size)
    assert h_n.shape == (num_layers, B, hidden_dim)
    assert c_n.shape == (num_layers, B, hidden_dim)
    # Tolerance loosened slightly vs. pure-f32: MXU operands are bf16 (f32 acc).
    assert jnp.allclose(logits, ref_logits, rtol=1e-2, atol=1e-2)
    assert jnp.allclose(h_n, ref_h, rtol=1e-2, atol=1e-2)
    assert jnp.allclose(c_n, ref_c, rtol=1e-2, atol=1e-2)

    print("KERNEL_OK")
</pallas_src>

<mosaic_0001>
module attributes {stable_mosaic.version = 11 : i64} {
  func.func @_matmul_bias_kernel(%arg0: i32, %arg1: i32, %arg2: i32, %arg3: memref<128x128xbf16, #tpu.memory_space<vmem>>, %arg4: memref<128x512xbf16, #tpu.memory_space<vmem>>, %arg5: memref<1x512xf32, #tpu.memory_space<vmem>>, %arg6: memref<128x512xf32, #tpu.memory_space<vmem>>, %arg7: memref<128x512xf32, #tpu.memory_space<vmem>>) attributes {dimension_semantics = [#tpu.dimension_semantics<parallel>, #tpu.dimension_semantics<parallel>, #tpu.dimension_semantics<arbitrary>], iteration_bounds = array<i64: 1, 1, 1>, scalar_prefetch = 0 : i64, scratch_operands = 1 : i64, tpu.core_type = #tpu.core_type<tc>, window_params = [{transform_indices = @transform_0, window_bounds = array<i64: 128, 128>}, {transform_indices = @transform_1, window_bounds = array<i64: 128, 512>}, {transform_indices = @transform_2, window_bounds = array<i64: 1, 512>}, {transform_indices = @transform_3, window_bounds = array<i64: 128, 512>}]} {
    %c0_i32 = arith.constant 0 : i32
    %0 = arith.cmpi eq, %arg2, %c0_i32 : i32
    %1 = arith.extui %0 : i1 to i32
    %c0_i32_0 = arith.constant 0 : i32
    %2 = arith.cmpi ne, %1, %c0_i32_0 : i32
    scf.if %2 {
      %cst_10 = arith.constant 0.000000e+00 : f32
      %12 = vector.broadcast %cst_10 : f32 to vector<128x512xf32>
      %c0_11 = arith.constant 0 : index
      %c0_12 = arith.constant 0 : index
      %13 = vector.load %arg7[%c0_11, %c0_12] : memref<128x512xf32, #tpu.memory_space<vmem>>, vector<128x512xf32>
      tpu.vector_store %arg7[%c0_11, %c0_12], %12 {strides = array<i32>} : memref<128x512xf32, #tpu.memory_space<vmem>>, vector<128x512xf32>,
    } else {
    }
    %c0 = arith.constant 0 : index
    %c0_1 = arith.constant 0 : index
    %3 = vector.load %arg7[%c0, %c0_1] : memref<128x512xf32, #tpu.memory_space<vmem>>, vector<128x512xf32>
    %c0_2 = arith.constant 0 : index
    %c0_3 = arith.constant 0 : index
    %4 = vector.load %arg3[%c0_2, %c0_3] : memref<128x128xbf16, #tpu.memory_space<vmem>>, vector<128x128xbf16>
    %c0_4 = arith.constant 0 : index
    %c0_5 = arith.constant 0 : index
    %5 = vector.load %arg4[%c0_4, %c0_5] : memref<128x512xbf16, #tpu.memory_space<vmem>>, vector<128x512xbf16>
    %cst = arith.constant dense<0.000000e+00> : vector<128x512xf32>
    %6 = tpu.matmul %4, %5, %cst {dimension_numbers = #tpu.dot_dimension_numbers<[1], [0], [0], [1], [0, 0, 1, 1], [], []>} : vector<128x128xbf16>, vector<128x512xbf16>, vector<128x512xf32> -> vector<128x512xf32>
    %7 = arith.addf %3, %6 : vector<128x512xf32>
    %c0_6 = arith.constant 0 : index
    %c0_7 = arith.constant 0 : index
    %8 = vector.load %arg7[%c0_6, %c0_7] : memref<128x512xf32, #tpu.memory_space<vmem>>, vector<128x512xf32>
    tpu.vector_store %arg7[%c0_6, %c0_7], %7 {strides = array<i32>} : memref<128x512xf32, #tpu.memory_space<vmem>>, vector<128x512xf32>,
    %c0_i32_8 = arith.constant 0 : i32
    %9 = arith.cmpi eq, %arg2, %c0_i32_8 : i32
    %10 = arith.extui %9 : i1 to i32
    %c0_i32_9 = arith.constant 0 : i32
    %11 = arith.cmpi ne, %10, %c0_i32_9 : i32
    scf.if %11 {
      %c0_10 = arith.constant 0 : index
      %c0_11 = arith.constant 0 : index
      %12 = vector.load %arg7[%c0_10, %c0_11] : memref<128x512xf32, #tpu.memory_space<vmem>>, vector<128x512xf32>
      %c0_12 = arith.constant 0 : index
      %c0_13 = arith.constant 0 : index
      %13 = vector.load %arg5[%c0_12, %c0_13] : memref<1x512xf32, #tpu.memory_space<vmem>>, vector<1x512xf32>
      %14 = vector.broadcast %13 : vector<1x512xf32> to vector<128x512xf32>
      %15 = arith.addf %12, %14 : vector<128x512xf32>
      %c0_14 = arith.constant 0 : index
      %c0_15 = arith.constant 0 : index
      %16 = vector.load %arg6[%c0_14, %c0_15] : memref<128x512xf32, #tpu.memory_space<vmem>>, vector<128x512xf32>
      tpu.vector_store %arg6[%c0_14, %c0_15], %15 {strides = array<i32>} : memref<128x512xf32, #tpu.memory_space<vmem>>, vector<128x512xf32>,
    } else {
    }
    return
  }
  func.func @transform_0(%arg0: i32, %arg1: i32, %arg2: i32) -> (i32, i32) {
    %c0_i32 = arith.constant 0 : i32
    return %arg0, %arg2 : i32, i32
  }
  func.func @transform_1(%arg0: i32, %arg1: i32, %arg2: i32) -> (i32, i32) {
    %c0_i32 = arith.constant 0 : i32
    return %arg2, %arg1 : i32, i32
  }
  func.func @transform_2(%arg0: i32, %arg1: i32, %arg2: i32) -> (i32, i32) {
    %c0_i32 = arith.constant 0 : i32
    %c0_i32_0 = arith.constant 0 : i32
    return %c0_i32, %arg1 : i32, i32
  }
  func.func @transform_3(%arg0: i32, %arg1: i32, %arg2: i32) -> (i32, i32) {
    %c0_i32 = arith.constant 0 : i32
    return %arg0, %arg1 : i32, i32
  }
}

</mosaic_0001>

<llo_original>
// kernel: tpu_custom_call.1
$region0: #{tpu_custom_call.1}
  #allocation0 [shape = 'u32[]', space=smem, size = 0x4, offset = 0x4, fixed_abs, tag = 'smem constant byte address 0x4 - core index']
  #allocation1 [shape = 'u32[72,128]{1,0:T(1,128)}', space=vmem, size = 0x9000, scoped, tag = 'internal scratch']
  #allocation2 [shape = 'f32[128,512]{1,0:T(8,128)}', space=vmem, size = 0x40000, scoped, tag = 'scratch operand']
  %s0 = inlined_call_operand.hbm [shape: bf16[128,128], index: 0, kind: input, shape index: {}]
  %s1 = inlined_call_operand.hbm [shape: bf16[128,512], index: 1, kind: input, shape index: {}]
  %s2 = inlined_call_operand.hbm [shape: f32[1,512], index: 2, kind: input, shape index: {}]
  %s3 = inlined_call_operand.hbm [shape: f32[128,512], index: 3, kind: output, shape index: {}]
  %s4 = sld [smem:[#allocation0]]
  $region42: #{tpu_custom_call.1} parent=0
    _
  %s6 = ssub.s32 1, %s4
  %s7 = scalar_select 0, %s6, %s4
  $region1: #{tpu_custom_call.1} parent=0
    #allocation3 [shape = 'u8[32768]{0}', space=vmem, size = 0x8000, scoped, tag = 'input window, operand 0, single buffered']
    #allocation4 [shape = 's32[1]{0}', space=sflag, size = 0x4, scoped, tag = 'scoped memory for tpu_custom_call.1']
    #allocation5 [shape = 's32[1]{0}', space=sflag, size = 0x4, scoped, tag = 'scoped memory for tpu_custom_call.1']
    #allocation6 [shape = 'u8[131072]{0}', space=vmem, size = 0x20000, scoped, tag = 'input window, operand 1, single buffered']
    #allocation7 [shape = 's32[1]{0}', space=sflag, size = 0x4, scoped, tag = 'scoped memory for tpu_custom_call.1']
    #allocation8 [shape = 'u8[2048]{0}', space=vmem, size = 0x800, scoped, tag = 'input window, operand 2, single buffered']
    #allocation9 [shape = 'u8[262144]{0}', space=vmem, size = 0x40000, scoped, tag = 'output window, operand 0, single buffered']
    %8 = vsyncpa [#allocation4], 0
    %9 = vsyncpa [#allocation7], 0
    %10 = vsyncpa [#allocation5], 0
    // Predicated region
    $region2: #{tpu_custom_call.1} parent=1 // pred_check
      _
    $region3: #{tpu_custom_call.1} parent=1 // pred_check_branch
      %12 = sbr.rel (0) target = $region5
    $region4: #{tpu_custom_call.1} parent=1 // pred_region
      %14 = vsyncadd [#allocation4], 0
      %s15 = sshll.u32 %s0, 4
      %s16 = int_to_ptr.hbm [resolvable:$true] %s15
      %s17 = sshll.u32 [#allocation3], 4
      %s18 = int_to_ptr.vmem [resolvable:$true] %s17
      %23 = dma.hbm_to_vmem [thread:$0]  %s16, 1024, %s18, [#allocation4], 64, 64, 4
    $region5: #{tpu_custom_call.1} parent=1 // pred_fallthru
      _
    // Predicated region
    $region6: #{tpu_custom_call.1} parent=1 // pred_check
      _
    $region7: #{tpu_custom_call.1} parent=1 // pred_check_branch
      %25 = sbr.rel (0) target = $region9
    $region8: #{tpu_custom_call.1} parent=1 // pred_region
      %27 = vsyncadd [#allocation7], 0
      %s28 = sshll.u32 %s1, 4
      %s29 = int_to_ptr.hbm [resolvable:$true] %s28
      %s30 = sshll.u32 [#allocation6], 4
      %s31 = int_to_ptr.vmem [resolvable:$true] %s30
      %36 = dma.hbm_to_vmem [thread:$0]  %s29, 4096, %s31, [#allocation7], 256, 256, 16
    $region9: #{tpu_custom_call.1} parent=1 // pred_fallthru
      _
    // Predicated region
    $region10: #{tpu_custom_call.1} parent=1 // pred_check
      _
    $region11: #{tpu_custom_call.1} parent=1 // pred_check_branch
      %38 = sbr.rel (0) target = $region13
    $region12: #{tpu_custom_call.1} parent=1 // pred_region
      %40 = vsyncadd [#allocation7], 0
      %s42 = sshll.u32 %s2, 4
      %s43 = int_to_ptr.hbm [resolvable:$true] %s42
      %s44 = sshll.u32 [#allocation8], 4
      %s45 = int_to_ptr.vmem [resolvable:$true] %s44
      %47 = dma.hbm_to_vmem [thread:$0]  %s43, 64, %s45, [#allocation7]
    $region13: #{tpu_custom_call.1} parent=1 // pred_fallthru
      _
    // Predicated region
    $region14: #{tpu_custom_call.1} parent=1 // pred_check
      _
    $region15: #{tpu_custom_call.1} parent=1 // pred_check_branch
      %49 = sbr.rel (0) target = $region17
    $region16: #{tpu_custom_call.1} parent=1 // pred_region
      %51 = dma.done [#allocation4], 1024
    $region17: #{tpu_custom_call.1} parent=1 // pred_fallthru
      _
    // Predicated region
    $region18: #{tpu_custom_call.1} parent=1 // pred_check
      _
    $region19: #{tpu_custom_call.1} parent=1 // pred_check_branch
      %53 = sbr.rel (0) target = $region21
    $region20: #{tpu_custom_call.1} parent=1 // pred_region
      %55 = dma.done [#allocation7], 4096
    $region21: #{tpu_custom_call.1} parent=1 // pred_fallthru
      _
    // Predicated region
    $region22: #{tpu_custom_call.1} parent=1 // pred_check
      _
    $region23: #{tpu_custom_call.1} parent=1 // pred_check_branch
      %57 = sbr.rel (0) target = $region25
    $region24: #{tpu_custom_call.1} parent=1 // pred_region
      %59 = dma.done [#allocation7], 64
    $region25: #{tpu_custom_call.1} parent=1 // pred_fallthru
      _
    %p60 = scmp.eq.s32.totalorder 0, 0
    // Predicated region
    $region26: #{tpu_custom_call.1} parent=1 // pred_check
      %p61 = pneg %p60
    $region27: #{tpu_custom_call.1} parent=1 // pred_check_branch
      %63 = sbr.rel (%p61) target = $region29
    $region28: #{tpu_custom_call.1} parent=1 // pred_region
      %64 = vst [vmem:[#allocation2] sm:$0xff] 0.0
      %65 = vst [vmem:[#allocation2 + $0x8] sm:$0xff] 0.0
      %66 = vst [vmem:[#allocation2 + $0x10] sm:$0xff] 0.0
      %67 = vst [vmem:[#allocation2 + $0x18] sm:$0xff] 0.0
      %68 = vst [vmem:[#allocation2 + $0x20] sm:$0xff] 0.0
      %69 = vst [vmem:[#allocation2 + $0x28] sm:$0xff] 0.0
      %70 = vst [vmem:[#allocation2 + $0x30] sm:$0xff] 0.0
      %71 = vst [vmem:[#allocation2 + $0x38] sm:$0xff] 0.0
      %72 = vst [vmem:[#allocation2 + $0x40] sm:$0xff] 0.0
      %73 = vst [vmem:[#allocation2 + $0x48] sm:$0xff] 0.0
      %74 = vst [vmem:[#allocation2 + $0x50] sm:$0xff] 0.0
      %75 = vst [vmem:[#allocation2 + $0x58] sm:$0xff] 0.0
      %76 = vst [vmem:[#allocation2 + $0x60] sm:$0xff] 0.0
      %77 = vst [vmem:[#allocation2 + $0x68] sm:$0xff] 0.0
      %78 = vst [vmem:[#allocation2 + $0x70] sm:$0xff] 0.0
      %79 = vst [vmem:[#allocation2 + $0x78] sm:$0xff] 0.0
      %80 = vst [vmem:[#allocation2 + $0x80] sm:$0xff] 0.0
      %81 = vst [vmem:[#allocation2 + $0x88] sm:$0xff] 0.0
      %82 = vst [vmem:[#allocation2 + $0x90] sm:$0xff] 0.0
      %83 = vst [vmem:[#allocation2 + $0x98] sm:$0xff] 0.0
      %84 = vst [vmem:[#allocation2 + $0xa0] sm:$0xff] 0.0
      %85 = vst [vmem:[#allocation2 + $0xa8] sm:$0xff] 0.0
      %86 = vst [vmem:[#allocation2 + $0xb0] sm:$0xff] 0.0
      %87 = vst [vmem:[#allocation2 + $0xb8] sm:$0xff] 0.0
      %88 = vst [vmem:[#allocation2 + $0xc0] sm:$0xff] 0.0
      %89 = vst [vmem:[#allocation2 + $0xc8] sm:$0xff] 0.0
      %90 = vst [vmem:[#allocation2 + $0xd0] sm:$0xff] 0.0
      %91 = vst [vmem:[#allocation2 + $0xd8] sm:$0xff] 0.0
      %92 = vst [vmem:[#allocation2 + $0xe0] sm:$0xff] 0.0
      %93 = vst [vmem:[#allocation2 + $0xe8] sm:$0xff] 0.0
      %94 = vst [vmem:[#allocation2 + $0xf0] sm:$0xff] 0.0
      %95 = vst [vmem:[#allocation2 + $0xf8] sm:$0xff] 0.0
      %96 = vst [vmem:[#allocation2 + $0x100] sm:$0xff] 0.0
      %97 = vst [vmem:[#allocation2 + $0x108] sm:$0xff] 0.0
      %98 = vst [vmem:[#allocation2 + $0x110] sm:$0xff] 0.0
      %99 = vst [vmem:[#allocation2 + $0x118] sm:$0xff] 0.0
      %100 = vst [vmem:[#allocation2 + $0x120] sm:$0xff] 0.0
      %101 = vst [vmem:[#allocation2 + $0x128] sm:$0xff] 0.0
      %102 = vst [vmem:[#allocation2 + $0x130] sm:$0xff] 0.0
      %103 = vst [vmem:[#allocation2 + $0x138] sm:$0xff] 0.0
      %104 = vst [vmem:[#allocation2 + $0x140] sm:$0xff] 0.0
      %105 = vst [vmem:[#allocation2 + $0x148] sm:$0xff] 0.0
      %106 = vst [vmem:[#allocation2 + $0x150] sm:$0xff] 0.0
      %107 = vst [vmem:[#allocation2 + $0x158] sm:$0xff] 0.0
      %108 = vst [vmem:[#allocation2 + $0x160] sm:$0xff] 0.0
      %109 = vst [vmem:[#allocation2 + $0x168] sm:$0xff] 0.0
      %110 = vst [vmem:[#allocation2 + $0x170] sm:$0xff] 0.0
      %111 = vst [vmem:[#allocation2 + $0x178] sm:$0xff] 0.0
      %112 = vst [vmem:[#allocation2 + $0x180] sm:$0xff] 0.0
      %113 = vst [vmem:[#allocation2 + $0x188] sm:$0xff] 0.0
      %114 = vst [vmem:[#allocation2 + $0x190] sm:$0xff] 0.0
      %115 = vst [vmem:[#allocation2 + $0x198] sm:$0xff] 0.0
      %116 = vst [vmem:[#allocation2 + $0x1a0] sm:$0xff] 0.0
      %117 = vst [vmem:[#allocation2 + $0x1a8] sm:$0xff] 0.0
      %118 = vst [vmem:[#allocation2 + $0x1b0] sm:$0xff] 0.0
      %119 = vst [vmem:[#allocation2 + $0x1b8] sm:$0xff] 0.0
      %120 = vst [vmem:[#allocation2 + $0x1c0] sm:$0xff] 0.0
      %121 = vst [vmem:[#allocation2 + $0x1c8] sm:$0xff] 0.0
      %122 = vst [vmem:[#allocation2 + $0x1d0] sm:$0xff] 0.0
      %123 = vst [vmem:[#allocation2 + $0x1d8] sm:$0xff] 0.0
      %124 = vst [vmem:[#allocation2 + $0x1e0] sm:$0xff] 0.0
      %125 = vst [vmem:[#allocation2 + $0x1e8] sm:$0xff] 0.0
      %126 = vst [vmem:[#allocation2 + $0x1f0] sm:$0xff] 0.0
      %127 = vst [vmem:[#allocation2 + $0x1f8] sm:$0xff] 0.0
    $region29: #{tpu_custom_call.1} parent=1 // pred_fallthru
      _
    %v128 = vld [vmem:[#allocation2] sm:$0xff]
    %v129 = vld [vmem:[#allocation2 + $0x8] sm:$0xff]
    %v130 = vld [vmem:[#allocation2 + $0x10] sm:$0xff]
    %v131 = vld [vmem:[#allocation2 + $0x18] sm:$0xff]
    %v132 = vld [vmem:[#allocation2 + $0x20] sm:$0xff]
    %v133 = vld [vmem:[#allocation2 + $0x28] sm:$0xff]
    %v134 = vld [vmem:[#allocation2 + $0x30] sm:$0xff]
    %v135 = vld [vmem:[#allocation2 + $0x38] sm:$0xff]
    %v136 = vld [vmem:[#allocation2 + $0x40] sm:$0xff]
    %v137 = vld [vmem:[#allocation2 + $0x48] sm:$0xff]
    %v138 = vld [vmem:[#allocation2 + $0x50] sm:$0xff]
    %v139 = vld [vmem:[#allocation2 + $0x58] sm:$0xff]
    %v140 = vld [vmem:[#allocation2 + $0x60] sm:$0xff]
    %v141 = vld [vmem:[#allocation2 + $0x68] sm:$0xff]
    %v142 = vld [vmem:[#allocation2 + $0x70] sm:$0xff]
    %v143 = vld [vmem:[#allocation2 + $0x78] sm:$0xff]
    %v144 = vld [vmem:[#allocation2 + $0x80] sm:$0xff]
    %v145 = vld [vmem:[#allocation2 + $0x88] sm:$0xff]
    %v146 = vld [vmem:[#allocation2 + $0x90] sm:$0xff]
    %v147 = vld [vmem:[#allocation2 + $0x98] sm:$0xff]
    %v148 = vld [vmem:[#allocation2 + $0xa0] sm:$0xff]
    %v149 = vld [vmem:[#allocation2 + $0xa8] sm:$0xff]
    %v150 = vld [vmem:[#allocation2 + $0xb0] sm:$0xff]
    %v151 = vld [vmem:[#allocation2 + $0xb8] sm:$0xff]
    %v152 = vld [vmem:[#allocation2 + $0xc0] sm:$0xff]
    %v153 = vld [vmem:[#allocation2 + $0xc8] sm:$0xff]
    %v154 = vld [vmem:[#allocation2 + $0xd0] sm:$0xff]
    %v155 = vld [vmem:[#allocation2 + $0xd8] sm:$0xff]
    %v156 = vld [vmem:[#allocation2 + $0xe0] sm:$0xff]
    %v157 = vld [vmem:[#allocation2 + $0xe8] sm:$0xff]
    %v158 = vld [vmem:[#allocation2 + $0xf0] sm:$0xff]
    %v159 = vld [vmem:[#allocation2 + $0xf8] sm:$0xff]
    %v160 = vld [vmem:[#allocation2 + $0x100] sm:$0xff]
    %v161 = vld [vmem:[#allocation2 + $0x108] sm:$0xff]
    %v162 = vld [vmem:[#allocation2 + $0x110] sm:$0xff]
    %v163 = vld [vmem:[#allocation2 + $0x118] sm:$0xff]
    %v164 = vld [vmem:[#allocation2 + $0x120] sm:$0xff]
    %v165 = vld [vmem:[#allocation2 + $0x128] sm:$0xff]
    %v166 = vld [vmem:[#allocation2 + $0x130] sm:$0xff]
    %v167 = vld [vmem:[#allocation2 + $0x138] sm:$0xff]
    %v168 = vld [vmem:[#allocation2 + $0x140] sm:$0xff]
    %v169 = vld [vmem:[#allocation2 + $0x148] sm:$0xff]
    %v170 = vld [vmem:[#allocation2 + $0x150] sm:$0xff]
    %v171 = vld [vmem:[#allocation2 + $0x158] sm:$0xff]
    %v172 = vld [vmem:[#allocation2 + $0x160] sm:$0xff]
    %v173 = vld [vmem:[#allocation2 + $0x168] sm:$0xff]
    %v174 = vld [vmem:[#allocation2 + $0x170] sm:$0xff]
    %v175 = vld [vmem:[#allocation2 + $0x178] sm:$0xff]
    %v176 = vld [vmem:[#allocation2 + $0x180] sm:$0xff]
    %v177 = vld [vmem:[#allocation2 + $0x188] sm:$0xff]
    %v178 = vld [vmem:[#allocation2 + $0x190] sm:$0xff]
    %v179 = vld [vmem:[#allocation2 + $0x198] sm:$0xff]
    %v180 = vld [vmem:[#allocation2 + $0x1a0] sm:$0xff]
    %v181 = vld [vmem:[#allocation2 + $0x1a8] sm:$0xff]
    %v182 = vld [vmem:[#allocation2 + $0x1b0] sm:$0xff]
    %v183 = vld [vmem:[#allocation2 + $0x1b8] sm:$0xff]
    %v184 = vld [vmem:[#allocation2 + $0x1c0] sm:$0xff]
    %v185 = vld [vmem:[#allocation2 + $0x1c8] sm:$0xff]
    %v186 = vld [vmem:[#allocation2 + $0x1d0] sm:$0xff]
    %v187 = vld [vmem:[#allocation2 + $0x1d8] sm:$0xff]
    %v188 = vld [vmem:[#allocation2 + $0x1e0] sm:$0xff]
    %v189 = vld [vmem:[#allocation2 + $0x1e8] sm:$0xff]
    %v190 = vld [vmem:[#allocation2 + $0x1f0] sm:$0xff]
    %v191 = vld [vmem:[#allocation2 + $0x1f8] sm:$0xff]
    %v192 = vld [vmem:[#allocation3] sm:$0xf]
    %v193 = vld [vmem:[#allocation3 + $0x4] sm:$0xf]
    %v194 = vld [vmem:[#allocation3 + $0x8] sm:$0xf]
    %v195 = vld [vmem:[#allocation3 + $0xc] sm:$0xf]
    %v196 = vld [vmem:[#allocation3 + $0x10] sm:$0xf]
    %v197 = vld [vmem:[#allocation3 + $0x14] sm:$0xf]
    %v198 = vld [vmem:[#allocation3 + $0x18] sm:$0xf]
    %v199 = vld [vmem:[#allocation3 + $0x1c] sm:$0xf]
    %v200 = vld [vmem:[#allocation3 + $0x20] sm:$0xf]
    %v201 = vld [vmem:[#allocation3 + $0x24] sm:$0xf]
    %v202 = vld [vmem:[#allocation3 + $0x28] sm:$0xf]
    %v203 = vld [vmem:[#allocation3 + $0x2c] sm:$0xf]
    %v204 = vld [vmem:[#allocation3 + $0x30] sm:$0xf]
    %v205 = vld [vmem:[#allocation3 + $0x34] sm:$0xf]
    %v206 = vld [vmem:[#allocation3 + $0x38] sm:$0xf]
    %v207 = vld [vmem:[#allocation3 + $0x3c] sm:$0xf]
    %v208 = vld [vmem:[#allocation6] sm:$0xff]
    %v209 = vld [vmem:[#allocation6 + $0x8] sm:$0xff]
    %v210 = vld [vmem:[#allocation6 + $0x10] sm:$0xff]
    %v211 = vld [vmem:[#allocation6 + $0x18] sm:$0xff]
    %v212 = vld [vmem:[#allocation6 + $0x20] sm:$0xff]
    %v213 = vld [vmem:[#allocation6 + $0x28] sm:$0xff]
    %v214 = vld [vmem:[#allocation6 + $0x30] sm:$0xff]
    %v215 = vld [vmem:[#allocation6 + $0x38] sm:$0xff]
    %v216 = vld [vmem:[#allocation6 + $0x40] sm:$0xff]
    %v217 = vld [vmem:[#allocation6 + $0x48] sm:$0xff]
    %v218 = vld [vmem:[#allocation6 + $0x50] sm:$0xff]
    %v219 = vld [vmem:[#allocation6 + $0x58] sm:$0xff]
    %v220 = vld [vmem:[#allocation6 + $0x60] sm:$0xff]
    %v221 = vld [vmem:[#allocation6 + $0x68] sm:$0xff]
    %v222 = vld [vmem:[#allocation6 + $0x70] sm:$0xff]
    %v223 = vld [vmem:[#allocation6 + $0x78] sm:$0xff]
    %v224 = vld [vmem:[#allocation6 + $0x80] sm:$0xff]
    %v225 = vld [vmem:[#allocation6 + $0x88] sm:$0xff]
    %v226 = vld [vmem:[#allocation6 + $0x90] sm:$0xff]
    %v227 = vld [vmem:[#allocation6 + $0x98] sm:$0xff]
    %v228 = vld [vmem:[#allocation6 + $0xa0] sm:$0xff]
    %v229 = vld [vmem:[#allocation6 + $0xa8] sm:$0xff]
    %v230 = vld [vmem:[#allocation6 + $0xb0] sm:$0xff]
    %v231 = vld [vmem:[#allocation6 + $0xb8] sm:$0xff]
    %v232 = vld [vmem:[#allocation6 + $0xc0] sm:$0xff]
    %v233 = vld [vmem:[#allocation6 + $0xc8] sm:$0xff]
    %v234 = vld [vmem:[#allocation6 + $0xd0] sm:$0xff]
    %v235 = vld [vmem:[#allocation6 + $0xd8] sm:$0xff]
    %v236 = vld [vmem:[#allocation6 + $0xe0] sm:$0xff]
    %v237 = vld [vmem:[#allocation6 + $0xe8] sm:$0xff]
    %v238 = vld [vmem:[#allocation6 + $0xf0] sm:$0xff]
    %v239 = vld [vmem:[#allocation6 + $0xf8] sm:$0xff]
    %v256 = vunpack.c.l.b16 %v192
    %v257 = vunpack.c.l.b16 %v193
    %v258 = vunpack.c.l.b16 %v194
    %v259 = vunpack.c.l.b16 %v195
    %v260 = vunpack.c.l.b16 %v196
    %v261 = vunpack.c.l.b16 %v197
    %v262 = vunpack.c.l.b16 %v198
    %v263 = vunpack.c.l.b16 %v199
    %v264 = vunpack.c.l.b16 %v200
    %v265 = vunpack.c.l.b16 %v201
    %v266 = vunpack.c.l.b16 %v202
    %v267 = vunpack.c.l.b16 %v203
    %v268 = vunpack.c.l.b16 %v204
    %v269 = vunpack.c.l.b16 %v205
    %v270 = vunpack.c.l.b16 %v206
    %v271 = vunpack.c.l.b16 %v207
    %v272 = vpack.c.b16 %v257, %v256
    %v273 = vpack.c.b16 %v259, %v258
    %v274 = vpack.c.b16 %v261, %v260
    %v275 = vpack.c.b16 %v263, %v262
    %v276 = vpack.c.b16 %v265, %v264
    %v277 = vpack.c.b16 %v267, %v266
    %v278 = vpack.c.b16 %v269, %v268
    %v279 = vpack.c.b16 %v271, %v270
    %v320 = vunpack.c.l.b16 %v208
    %v321 = vunpack.c.h.b16 %v208
    %v322 = vunpack.c.l.b16 %v209
    %v323 = vunpack.c.h.b16 %v209
    %v324 = vunpack.c.l.b16 %v210
    %v325 = vunpack.c.h.b16 %v210
    %v326 = vunpack.c.l.b16 %v211
    %v327 = vunpack.c.h.b16 %v211
    %v328 = vunpack.c.l.b16 %v212
    %v329 = vunpack.c.h.b16 %v212
    %v330 = vunpack.c.l.b16 %v213
    %v331 = vunpack.c.h.b16 %v213
    %v332 = vunpack.c.l.b16 %v214
    %v333 = vunpack.c.h.b16 %v214
    %v334 = vunpack.c.l.b16 %v215
    %v335 = vunpack.c.h.b16 %v215
    %v336 = vunpack.c.l.b16 %v216
    %v337 = vunpack.c.h.b16 %v216
    %v338 = vunpack.c.l.b16 %v217
    %v339 = vunpack.c.h.b16 %v217
    %v340 = vunpack.c.l.b16 %v218
    %v341 = vunpack.c.h.b16 %v218
    %v342 = vunpack.c.l.b16 %v219
    %v343 = vunpack.c.h.b16 %v219
    %v344 = vunpack.c.l.b16 %v220
    %v345 = vunpack.c.h.b16 %v220
    %v346 = vunpack.c.l.b16 %v221
    %v347 = vunpack.c.h.b16 %v221
    %v348 = vunpack.c.l.b16 %v222
    %v349 = vunpack.c.h.b16 %v222
    %v350 = vunpack.c.l.b16 %v223
    %v351 = vunpack.c.h.b16 %v223
    %v352 = vunpack.c.l.b16 %v224
    %v353 = vunpack.c.h.b16 %v224
    %v354 = vunpack.c.l.b16 %v225
    %v355 = vunpack.c.h.b16 %v225
    %v356 = vunpack.c.l.b16 %v226
    %v357 = vunpack.c.h.b16 %v226
    %v358 = vunpack.c.l.b16 %v227
    %v359 = vunpack.c.h.b16 %v227
    %v360 = vunpack.c.l.b16 %v228
    %v361 = vunpack.c.h.b16 %v228
    %v362 = vunpack.c.l.b16 %v229
    %v363 = vunpack.c.h.b16 %v229
    %v364 = vunpack.c.l.b16 %v230
    %v365 = vunpack.c.h.b16 %v230
    %v366 = vunpack.c.l.b16 %v231
    %v367 = vunpack.c.h.b16 %v231
    %v368 = vunpack.c.l.b16 %v232
    %v369 = vunpack.c.h.b16 %v232
    %v370 = vunpack.c.l.b16 %v233
    %v371 = vunpack.c.h.b16 %v233
    %v372 = vunpack.c.l.b16 %v234
    %v373 = vunpack.c.h.b16 %v234
    %v374 = vunpack.c.l.b16 %v235
    %v375 = vunpack.c.h.b16 %v235
    %v376 = vunpack.c.l.b16 %v236
    %v377 = vunpack.c.h.b16 %v236
    %v378 = vunpack.c.l.b16 %v237
    %v379 = vunpack.c.h.b16 %v237
    %v380 = vunpack.c.l.b16 %v238
    %v381 = vunpack.c.h.b16 %v238
    %v382 = vunpack.c.l.b16 %v239
    %v383 = vunpack.c.h.b16 %v239
    %v384 = vpack.c.b16 %v324, %v320
    %v385 = vpack.c.b16 %v325, %v321
    %v386 = vpack.c.b16 %v326, %v322
    %v387 = vpack.c.b16 %v327, %v323
    %v388 = vpack.c.b16 %v332, %v328
    %v389 = vpack.c.b16 %v333, %v329
    %v390 = vpack.c.b16 %v334, %v330
    %v391 = vpack.c.b16 %v335, %v331
    %v392 = vpack.c.b16 %v340, %v336
    %v393 = vpack.c.b16 %v341, %v337
    %v394 = vpack.c.b16 %v342, %v338
    %v395 = vpack.c.b16 %v343, %v339
    %v396 = vpack.c.b16 %v348, %v344
    %v397 = vpack.c.b16 %v349, %v345
    %v398 = vpack.c.b16 %v350, %v346
    %v399 = vpack.c.b16 %v351, %v347
    %v400 = vpack.c.b16 %v356, %v352
    %v401 = vpack.c.b16 %v357, %v353
    %v402 = vpack.c.b16 %v358, %v354
    %v403 = vpack.c.b16 %v359, %v355
    %v404 = vpack.c.b16 %v364, %v360
    %v405 = vpack.c.b16 %v365, %v361
    %v406 = vpack.c.b16 %v366, %v362
    %v407 = vpack.c.b16 %v367, %v363
    %v408 = vpack.c.b16 %v372, %v368
    %v409 = vpack.c.b16 %v373, %v369
    %v410 = vpack.c.b16 %v374, %v370
    %v411 = vpack.c.b16 %v375, %v371
    %v412 = vpack.c.b16 %v380, %v376
    %v413 = vpack.c.b16 %v381, %v377
    %v414 = vpack.c.b16 %v382, %v378
    %v415 = vpack.c.b16 %v383, %v379
    %448 = vmatpush.bf16.msra.mxu0 %v412
    %449 = vmatpush.bf16.msra.mxu0 %v408
    %450 = vmatpush.bf16.msra.mxu0 %v404
    %451 = vmatpush.bf16.msra.mxu0 %v400
    %452 = vmatpush.bf16.msra.mxu0 %v396
    %453 = vmatpush.bf16.msra.mxu0 %v392
    %454 = vmatpush.bf16.msra.mxu0 %v388
    %455 = vmatpush.bf16.msra.mxu0 %v384
    %456 = vmatmul.bf16.gmra.mxu0 %v272
    %v457 = vpop.f32.mrf.mxu0
    %v458 = vadd.f32 0.0, %v457
    %v459 = vpop.f32.mrf.mxu0
    %v460 = vadd.f32 0.0, %v459
    %461 = vmatmul.bf16.gmra.mxu0 %v273
    %v462 = vpop.f32.mrf.mxu0
    %v463 = vadd.f32 0.0, %v462
    %v464 = vpop.f32.mrf.mxu0
    %v465 = vadd.f32 0.0, %v464
    %466 = vmatmul.bf16.gmra.mxu0 %v274
    %v467 = vpop.f32.mrf.mxu0
    %v468 = vadd.f32 0.0, %v467
    %v469 = vpop.f32.mrf.mxu0
    %v470 = vadd.f32 0.0, %v469
    %471 = vmatmul.bf16.gmra.mxu0 %v275
    %v472 = vpop.f32.mrf.mxu0
    %v473 = vadd.f32 0.0, %v472
    %v474 = vpop.f32.mrf.mxu0
    %v475 = vadd.f32 0.0, %v474
    %476 = vmatmul.bf16.gmra.mxu0 %v276
    %v477 = vpop.f32.mrf.mxu0
    %v478 = vadd.f32 0.0, %v477
    %v479 = vpop.f32.mrf.mxu0
    %v480 = vadd.f32 0.0, %v479
    %481 = vmatmul.bf16.gmra.mxu0 %v277
    %v482 = vpop.f32.mrf.mxu0
    %v483 = vadd.f32 0.0, %v482
    %v484 = vpop.f32.mrf.mxu0
    %v485 = vadd.f32 0.0, %v484
    %486 = vmatmul.bf16.gmra.mxu0 %v278
    %v487 = vpop.f32.mrf.mxu0
    %v488 = vadd.f32 0.0, %v487
    %v489 = vpop.f32.mrf.mxu0
    %v490 = vadd.f32 0.0, %v489
    %491 = vmatmul.bf16.gmra.mxu0 %v279
    %v492 = vpop.f32.mrf.mxu0
    %v493 = vadd.f32 0.0, %v492
    %v494 = vpop.f32.mrf.mxu0
    %v495 = vadd.f32 0.0, %v494
    %496 = vdwg.mxu0
    %497 = vmatpush.bf16.msra.mxu0 %v413
    %498 = vmatpush.bf16.msra.mxu0 %v409
    %499 = vmatpush.bf16.msra.mxu0 %v405
    %500 = vmatpush.bf16.msra.mxu0 %v401
    %501 = vmatpush.bf16.msra.mxu0 %v397
    %502 = vmatpush.bf16.msra.mxu0 %v393
    %503 = vmatpush.bf16.msra.mxu0 %v389
    %504 = vmatpush.bf16.msra.mxu0 %v385
    %505 = vmatmul.bf16.gmra.mxu0 %v272
    %v506 = vpop.f32.mrf.mxu0
    %v507 = vadd.f32 0.0, %v506
    %v508 = vpop.f32.mrf.mxu0
    %v509 = vadd.f32 0.0, %v508
    %510 = vmatmul.bf16.gmra.mxu0 %v273
    %v511 = vpop.f32.mrf.mxu0
    %v512 = vadd.f32 0.0, %v511
    %v513 = vpop.f32.mrf.mxu0
    %v514 = vadd.f32 0.0, %v513
    %515 = vmatmul.bf16.gmra.mxu0 %v274
    %v516 = vpop.f32.mrf.mxu0
    %v517 = vadd.f32 0.0, %v516
    %v518 = vpop.f32.mrf.mxu0
    %v519 = vadd.f32 0.0, %v518
    %520 = vmatmul.bf16.gmra.mxu0 %v275
    %v521 = vpop.f32.mrf.mxu0
    %v522 = vadd.f32 0.0, %v521
    %v523 = vpop.f32.mrf.mxu0
    %v524 = vadd.f32 0.0, %v523
    %525 = vmatmul.bf16.gmra.mxu0 %v276
    %v526 = vpop.f32.mrf.mxu0
    %v527 = vadd.f32 0.0, %v526
    %v528 = vpop.f32.mrf.mxu0
    %v529 = vadd.f32 0.0, %v528
    %530 = vmatmul.bf16.gmra.mxu0 %v277
    %v531 = vpop.f32.mrf.mxu0
    %v532 = vadd.f32 0.0, %v531
    %v533 = vpop.f32.mrf.mxu0
    %v534 = vadd.f32 0.0, %v533
    %535 = vmatmul.bf16.gmra.mxu0 %v278
    %v536 = vpop.f32.mrf.mxu0
    %v537 = vadd.f32 0.0, %v536
    %v538 = vpop.f32.mrf.mxu0
    %v539 = vadd.f32 0.0, %v538
    %540 = vmatmul.bf16.gmra.mxu0 %v279
    %v541 = vpop.f32.mrf.mxu0
    %v542 = vadd.f32 0.0, %v541
    %v543 = vpop.f32.mrf.mxu0
    %v544 = vadd.f32 0.0, %v543
    %545 = vdwg.mxu0
    %546 = vmatpush.bf16.msra.mxu0 %v414
    %547 = vmatpush.bf16.msra.mxu0 %v410
    %548 = vmatpush.bf16.msra.mxu0 %v406
    %549 = vmatpush.bf16.msra.mxu0 %v402
    %550 = vmatpush.bf16.msra.mxu0 %v398
    %551 = vmatpush.bf16.msra.mxu0 %v394
    %552 = vmatpush.bf16.msra.mxu0 %v390
    %553 = vmatpush.bf16.msra.mxu0 %v386
    %554 = vmatmul.bf16.gmra.mxu0 %v272
    %v555 = vpop.f32.mrf.mxu0
    %v556 = vadd.f32 0.0, %v555
    %v557 = vpop.f32.mrf.mxu0
    %v558 = vadd.f32 0.0, %v557
    %559 = vmatmul.bf16.gmra.mxu0 %v273
    %v560 = vpop.f32.mrf.mxu0
    %v561 = vadd.f32 0.0, %v560
    %v562 = vpop.f32.mrf.mxu0
    %v563 = vadd.f32 0.0, %v562
    %564 = vmatmul.bf16.gmra.mxu0 %v274
    %v565 = vpop.f32.mrf.mxu0
    %v566 = vadd.f32 0.0, %v565
    %v567 = vpop.f32.mrf.mxu0
    %v568 = vadd.f32 0.0, %v567
    %569 = vmatmul.bf16.gmra.mxu0 %v275
    %v570 = vpop.f32.mrf.mxu0
    %v571 = vadd.f32 0.0, %v570
    %v572 = vpop.f32.mrf.mxu0
    %v573 = vadd.f32 0.0, %v572
    %574 = vmatmul.bf16.gmra.mxu0 %v276
    %v575 = vpop.f32.mrf.mxu0
    %v576 = vadd.f32 0.0, %v575
    %v577 = vpop.f32.mrf.mxu0
    %v578 = vadd.f32 0.0, %v577
    %579 = vmatmul.bf16.gmra.mxu0 %v277
    %v580 = vpop.f32.mrf.mxu0
    %v581 = vadd.f32 0.0, %v580
    %v582 = vpop.f32.mrf.mxu0
    %v583 = vadd.f32 0.0, %v582
    %584 = vmatmul.bf16.gmra.mxu0 %v278
    %v585 = vpop.f32.mrf.mxu0
    %v586 = vadd.f32 0.0, %v585
    %v587 = vpop.f32.mrf.mxu0
    %v588 = vadd.f32 0.0, %v587
    %589 = vmatmul.bf16.gmra.mxu0 %v279
    %v590 = vpop.f32.mrf.mxu0
    %v591 = vadd.f32 0.0, %v590
    %v592 = vpop.f32.mrf.mxu0
    %v593 = vadd.f32 0.0, %v592
    %594 = vdwg.mxu0
    %595 = vmatpush.bf16.msra.mxu0 %v415
    %596 = vmatpush.bf16.msra.mxu0 %v411
    %597 = vmatpush.bf16.msra.mxu0 %v407
    %598 = vmatpush.bf16.msra.mxu0 %v403
    %599 = vmatpush.bf16.msra.mxu0 %v399
    %600 = vmatpush.bf16.msra.mxu0 %v395
    %601 = vmatpush.bf16.msra.mxu0 %v391
    %602 = vmatpush.bf16.msra.mxu0 %v387
    %603 = vmatmul.bf16.gmra.mxu0 %v272
    %v604 = vpop.f32.mrf.mxu0
    %v605 = vadd.f32 0.0, %v604
    %v606 = vpop.f32.mrf.mxu0
    %v607 = vadd.f32 0.0, %v606
    %608 = vmatmul.bf16.gmra.mxu0 %v273
    %v609 = vpop.f32.mrf.mxu0
    %v610 = vadd.f32 0.0, %v609
    %v611 = vpop.f32.mrf.mxu0
    %v612 = vadd.f32 0.0, %v611
    %613 = vmatmul.bf16.gmra.mxu0 %v274
    %v614 = vpop.f32.mrf.mxu0
    %v615 = vadd.f32 0.0, %v614
    %v616 = vpop.f32.mrf.mxu0
    %v617 = vadd.f32 0.0, %v616
    %618 = vmatmul.bf16.gmra.mxu0 %v275
    %v619 = vpop.f32.mrf.mxu0
    %v620 = vadd.f32 0.0, %v619
    %v621 = vpop.f32.mrf.mxu0
    %v622 = vadd.f32 0.0, %v621
    %623 = vmatmul.bf16.gmra.mxu0 %v276
    %v624 = vpop.f32.mrf.mxu0
    %v625 = vadd.f32 0.0, %v624
    %v626 = vpop.f32.mrf.mxu0
    %v627 = vadd.f32 0.0, %v626
    %628 = vmatmul.bf16.gmra.mxu0 %v277
    %v629 = vpop.f32.mrf.mxu0
    %v630 = vadd.f32 0.0, %v629
    %v631 = vpop.f32.mrf.mxu0
    %v632 = vadd.f32 0.0, %v631
    %633 = vmatmul.bf16.gmra.mxu0 %v278
    %v634 = vpop.f32.mrf.mxu0
    %v635 = vadd.f32 0.0, %v634
    %v636 = vpop.f32.mrf.mxu0
    %v637 = vadd.f32 0.0, %v636
    %638 = vmatmul.bf16.gmra.mxu0 %v279
    %v639 = vpop.f32.mrf.mxu0
    %v640 = vadd.f32 0.0, %v639
    %v641 = vpop.f32.mrf.mxu0
    %v642 = vadd.f32 0.0, %v641
    %643 = vdwg.mxu0
    %v644 = vadd.f32 %v128, %v458
    %v645 = vadd.f32 %v129, %v507
    %v646 = vadd.f32 %v130, %v556
    %v647 = vadd.f32 %v131, %v605
    %v648 = vadd.f32 %v132, %v460
    %v649 = vadd.f32 %v133, %v509
    %v650 = vadd.f32 %v134, %v558
    %v651 = vadd.f32 %v135, %v607
    %v652 = vadd.f32 %v136, %v463
    %v653 = vadd.f32 %v137, %v512
    %v654 = vadd.f32 %v138, %v561
    %v655 = vadd.f32 %v139, %v610
    %v656 = vadd.f32 %v140, %v465
    %v657 = vadd.f32 %v141, %v514
    %v658 = vadd.f32 %v142, %v563
    %v659 = vadd.f32 %v143, %v612
    %v660 = vadd.f32 %v144, %v468
    %v661 = vadd.f32 %v145, %v517
    %v662 = vadd.f32 %v146, %v566
    %v663 = vadd.f32 %v147, %v615
    %v664 = vadd.f32 %v148, %v470
    %v665 = vadd.f32 %v149, %v519
    %v666 = vadd.f32 %v150, %v568
    %v667 = vadd.f32 %v151, %v617
    %v668 = vadd.f32 %v152, %v473
    %v669 = vadd.f32 %v153, %v522
    %v670 = vadd.f32 %v154, %v571
    %v671 = vadd.f32 %v155, %v620
    %v672 = vadd.f32 %v156, %v475
    %v673 = vadd.f32 %v157, %v524
    %v674 = vadd.f32 %v158, %v573
    %v675 = vadd.f32 %v159, %v622
    %v676 = vadd.f32 %v160, %v478
    %v677 = vadd.f32 %v161, %v527
    %v678 = vadd.f32 %v162, %v576
    %v679 = vadd.f32 %v163, %v625
    %v680 = vadd.f32 %v164, %v480
    %v681 = vadd.f32 %v165, %v529
    %v682 = vadd.f32 %v166, %v578
    %v683 = vadd.f32 %v167, %v627
    %v684 = vadd.f32 %v168, %v483
    %v685 = vadd.f32 %v169, %v532
    %v686 = vadd.f32 %v170, %v581
    %v687 = vadd.f32 %v171, %v630
    %v688 = vadd.f32 %v172, %v485
    %v689 = vadd.f32 %v173, %v534
    %v690 = vadd.f32 %v174, %v583
    %v691 = vadd.f32 %v175, %v632
    %v692 = vadd.f32 %v176, %v488
    %v693 = vadd.f32 %v177, %v537
    %v694 = vadd.f32 %v178, %v586
    %v695 = vadd.f32 %v179, %v635
    %v696 = vadd.f32 %v180, %v490
    %v697 = vadd.f32 %v181, %v539
    %v698 = vadd.f32 %v182, %v588
    %v699 = vadd.f32 %v183, %v637
    %v700 = vadd.f32 %v184, %v493
    %v701 = vadd.f32 %v185, %v542
    %v702 = vadd.f32 %v186, %v591
    %v703 = vadd.f32 %v187, %v640
    %v704 = vadd.f32 %v188, %v495
    %v705 = vadd.f32 %v189, %v544
    %v706 = vadd.f32 %v190, %v593
    %v707 = vadd.f32 %v191, %v642
    %708 = vst [vmem:[#allocation2] sm:$0xff] %v644
    %709 = vst [vmem:[#allocation2 + $0x8] sm:$0xff] %v645
    %710 = vst [vmem:[#allocation2 + $0x10] sm:$0xff] %v646
    %711 = vst [vmem:[#allocation2 + $0x18] sm:$0xff] %v647
    %712 = vst [vmem:[#allocation2 + $0x20] sm:$0xff] %v648
    %713 = vst [vmem:[#allocation2 + $0x28] sm:$0xff] %v649
    %714 = vst [vmem:[#allocation2 + $0x30] sm:$0xff] %v650
    %715 = vst [vmem:[#allocation2 + $0x38] sm:$0xff] %v651
    %716 = vst [vmem:[#allocation2 + $0x40] sm:$0xff] %v652
    %717 = vst [vmem:[#allocation2 + $0x48] sm:$0xff] %v653
    %718 = vst [vmem:[#allocation2 + $0x50] sm:$0xff] %v654
    %719 = vst [vmem:[#allocation2 + $0x58] sm:$0xff] %v655
    %720 = vst [vmem:[#allocation2 + $0x60] sm:$0xff] %v656
    %721 = vst [vmem:[#allocation2 + $0x68] sm:$0xff] %v657
    %722 = vst [vmem:[#allocation2 + $0x70] sm:$0xff] %v658
    %723 = vst [vmem:[#allocation2 + $0x78] sm:$0xff] %v659
    %724 = vst [vmem:[#allocation2 + $0x80] sm:$0xff] %v660
    %725 = vst [vmem:[#allocation2 + $0x88] sm:$0xff] %v661
    %726 = vst [vmem:[#allocation2 + $0x90] sm:$0xff] %v662
    %727 = vst [vmem:[#allocation2 + $0x98] sm:$0xff] %v663
    %728 = vst [vmem:[#allocation2 + $0xa0] sm:$0xff] %v664
    %729 = vst [vmem:[#allocation2 + $0xa8] sm:$0xff] %v665
    %730 = vst [vmem:[#allocation2 + $0xb0] sm:$0xff] %v666
    %731 = vst [vmem:[#allocation2 + $0xb8] sm:$0xff] %v667
    %732 = vst [vmem:[#allocation2 + $0xc0] sm:$0xff] %v668
    %733 = vst [vmem:[#allocation2 + $0xc8] sm:$0xff] %v669
    %734 = vst [vmem:[#allocation2 + $0xd0] sm:$0xff] %v670
    %735 = vst [vmem:[#allocation2 + $0xd8] sm:$0xff] %v671
    %736 = vst [vmem:[#allocation2 + $0xe0] sm:$0xff] %v672
    %737 = vst [vmem:[#allocation2 + $0xe8] sm:$0xff] %v673
    %738 = vst [vmem:[#allocation2 + $0xf0] sm:$0xff] %v674
    %739 = vst [vmem:[#allocation2 + $0xf8] sm:$0xff] %v675
    %740 = vst [vmem:[#allocation2 + $0x100] sm:$0xff] %v676
    %741 = vst [vmem:[#allocation2 + $0x108] sm:$0xff] %v677
    %742 = vst [vmem:[#allocation2 + $0x110] sm:$0xff] %v678
    %743 = vst [vmem:[#allocation2 + $0x118] sm:$0xff] %v679
    %744 = vst [vmem:[#allocation2 + $0x120] sm:$0xff] %v680
    %745 = vst [vmem:[#allocation2 + $0x128] sm:$0xff] %v681
    %746 = vst [vmem:[#allocation2 + $0x130] sm:$0xff] %v682
    %747 = vst [vmem:[#allocation2 + $0x138] sm:$0xff] %v683
    %748 = vst [vmem:[#allocation2 + $0x140] sm:$0xff] %v684
    %749 = vst [vmem:[#allocation2 + $0x148] sm:$0xff] %v685
    %750 = vst [vmem:[#allocation2 + $0x150] sm:$0xff] %v686
    %751 = vst [vmem:[#allocation2 + $0x158] sm:$0xff] %v687
    %752 = vst [vmem:[#allocation2 + $0x160] sm:$0xff] %v688
    %753 = vst [vmem:[#allocation2 + $0x168] sm:$0xff] %v689
    %754 = vst [vmem:[#allocation2 + $0x170] sm:$0xff] %v690
    %755 = vst [vmem:[#allocation2 + $0x178] sm:$0xff] %v691
    %756 = vst [vmem:[#allocation2 + $0x180] sm:$0xff] %v692
    %757 = vst [vmem:[#allocation2 + $0x188] sm:$0xff] %v693
    %758 = vst [vmem:[#allocation2 + $0x190] sm:$0xff] %v694
    %759 = vst [vmem:[#allocation2 + $0x198] sm:$0xff] %v695
    %760 = vst [vmem:[#allocation2 + $0x1a0] sm:$0xff] %v696
    %761 = vst [vmem:[#allocation2 + $0x1a8] sm:$0xff] %v697
    %762 = vst [vmem:[#allocation2 + $0x1b0] sm:$0xff] %v698
    %763 = vst [vmem:[#allocation2 + $0x1b8] sm:$0xff] %v699
    %764 = vst [vmem:[#allocation2 + $0x1c0] sm:$0xff] %v700
    %765 = vst [vmem:[#allocation2 + $0x1c8] sm:$0xff] %v701
    %766 = vst [vmem:[#allocation2 + $0x1d0] sm:$0xff] %v702
    %767 = vst [vmem:[#allocation2 + $0x1d8] sm:$0xff] %v703
    %768 = vst [vmem:[#allocation2 + $0x1e0] sm:$0xff] %v704
    %769 = vst [vmem:[#allocation2 + $0x1e8] sm:$0xff] %v705
    %770 = vst [vmem:[#allocation2 + $0x1f0] sm:$0xff] %v706
    %771 = vst [vmem:[#allocation2 + $0x1f8] sm:$0xff] %v707
    // Predicated region
    $region30: #{tpu_custom_call.1} parent=1 // pred_check
      %p772 = pneg %p60
    $region31: #{tpu_custom_call.1} parent=1 // pred_check_branch
      %774 = sbr.rel (%p772) target = $region33
    $region32: #{tpu_custom_call.1} parent=1 // pred_region
      %v775 = vld [vmem:[#allocation2] sm:$0xff]
      %v776 = vld [vmem:[#allocation2 + $0x8] sm:$0xff]
      %v777 = vld [vmem:[#allocation2 + $0x10] sm:$0xff]
      %v778 = vld [vmem:[#allocation2 + $0x18] sm:$0xff]
      %v779 = vld [vmem:[#allocation2 + $0x20] sm:$0xff]
      %v780 = vld [vmem:[#allocation2 + $0x28] sm:$0xff]
      %v781 = vld [vmem:[#allocation2 + $0x30] sm:$0xff]
      %v782 = vld [vmem:[#allocation2 + $0x38] sm:$0xff]
      %v783 = vld [vmem:[#allocation2 + $0x40] sm:$0xff]
      %v784 = vld [vmem:[#allocation2 + $0x48] sm:$0xff]
      %v785 = vld [vmem:[#allocation2 + $0x50] sm:$0xff]
      %v786 = vld [vmem:[#allocation2 + $0x58] sm:$0xff]
      %v787 = vld [vmem:[#allocation2 + $0x60] sm:$0xff]
      %v788 = vld [vmem:[#allocation2 + $0x68] sm:$0xff]
      %v789 = vld [vmem:[#allocation2 + $0x70] sm:$0xff]
      %v790 = vld [vmem:[#allocation2 + $0x78] sm:$0xff]
      %v791 = vld [vmem:[#allocation2 + $0x80] sm:$0xff]
      %v792 = vld [vmem:[#allocation2 + $0x88] sm:$0xff]
      %v793 = vld [vmem:[#allocation2 + $0x90] sm:$0xff]
      %v794 = vld [vmem:[#allocation2 + $0x98] sm:$0xff]
      %v795 = vld [vmem:[#allocation2 + $0xa0] sm:$0xff]
      %v796 = vld [vmem:[#allocation2 + $0xa8] sm:$0xff]
      %v797 = vld [vmem:[#allocation2 + $0xb0] sm:$0xff]
      %v798 = vld [vmem:[#allocation2 + $0xb8] sm:$0xff]
      %v799 = vld [vmem:[#allocation2 + $0xc0] sm:$0xff]
      %v800 = vld [vmem:[#allocation2 + $0xc8] sm:$0xff]
      %v801 = vld [vmem:[#allocation2 + $0xd0] sm:$0xff]
      %v802 = vld [vmem:[#allocation2 + $0xd8] sm:$0xff]
      %v803 = vld [vmem:[#allocation2 + $0xe0] sm:$0xff]
      %v804 = vld [vmem:[#allocation2 + $0xe8] sm:$0xff]
      %v805 = vld [vmem:[#allocation2 + $0xf0] sm:$0xff]
      %v806 = vld [vmem:[#allocation2 + $0xf8] sm:$0xff]
      %v807 = vld [vmem:[#allocation2 + $0x100] sm:$0xff]
      %v808 = vld [vmem:[#allocation2 + $0x108] sm:$0xff]
      %v809 = vld [vmem:[#allocation2 + $0x110] sm:$0xff]
      %v810 = vld [vmem:[#allocation2 + $0x118] sm:$0xff]
      %v811 = vld [vmem:[#allocation2 + $0x120] sm:$0xff]
      %v812 = vld [vmem:[#allocation2 + $0x128] sm:$0xff]
      %v813 = vld [vmem:[#allocation2 + $0x130] sm:$0xff]
      %v814 = vld [vmem:[#allocation2 + $0x138] sm:$0xff]
      %v815 = vld [vmem:[#allocation2 + $0x140] sm:$0xff]
      %v816 = vld [vmem:[#allocation2 + $0x148] sm:$0xff]
      %v817 = vld [vmem:[#allocation2 + $0x150] sm:$0xff]
      %v818 = vld [vmem:[#allocation2 + $0x158] sm:$0xff]
      %v819 = vld [vmem:[#allocation2 + $0x160] sm:$0xff]
      %v820 = vld [vmem:[#allocation2 + $0x168] sm:$0xff]
      %v821 = vld [vmem:[#allocation2 + $0x170] sm:$0xff]
      %v822 = vld [vmem:[#allocation2 + $0x178] sm:$0xff]
      %v823 = vld [vmem:[#allocation2 + $0x180] sm:$0xff]
      %v824 = vld [vmem:[#allocation2 + $0x188] sm:$0xff]
      %v825 = vld [vmem:[#allocation2 + $0x190] sm:$0xff]
      %v826 = vld [vmem:[#allocation2 + $0x198] sm:$0xff]
      %v827 = vld [vmem:[#allocation2 + $0x1a0] sm:$0xff]
      %v828 = vld [vmem:[#allocation2 + $0x1a8] sm:$0xff]
      %v829 = vld [vmem:[#allocation2 + $0x1b0] sm:$0xff]
      %v830 = vld [vmem:[#allocation2 + $0x1b8] sm:$0xff]
      %v831 = vld [vmem:[#allocation2 + $0x1c0] sm:$0xff]
      %v832 = vld [vmem:[#allocation2 + $0x1c8] sm:$0xff]
      %v833 = vld [vmem:[#allocation2 + $0x1d0] sm:$0xff]
      %v834 = vld [vmem:[#allocation2 + $0x1d8] sm:$0xff]
      %v835 = vld [vmem:[#allocation2 + $0x1e0] sm:$0xff]
      %v836 = vld [vmem:[#allocation2 + $0x1e8] sm:$0xff]
      %v837 = vld [vmem:[#allocation2 + $0x1f0] sm:$0xff]
      %v838 = vld [vmem:[#allocation2 + $0x1f8] sm:$0xff]
      %v839 = vld [vmem:[#allocation8] sm:$0xf]
      %v841 = vperm.slane %v839, 0
      %v842 = vperm.slane %v839, 1
      %v843 = vperm.slane %v839, 2
      %v844 = vperm.slane %v839, 3
      %v849 = vadd.f32 %v775, %v841
      %v850 = vadd.f32 %v776, %v842
      %v851 = vadd.f32 %v777, %v843
      %v852 = vadd.f32 %v778, %v844
      %v853 = vadd.f32 %v779, %v841
      %v854 = vadd.f32 %v780, %v842
      %v855 = vadd.f32 %v781, %v843
      %v856 = vadd.f32 %v782, %v844
      %v857 = vadd.f32 %v783, %v841
      %v858 = vadd.f32 %v784, %v842
      %v859 = vadd.f32 %v785, %v843
      %v860 = vadd.f32 %v786, %v844
      %v861 = vadd.f32 %v787, %v841
      %v862 = vadd.f32 %v788, %v842
      %v863 = vadd.f32 %v789, %v843
      %v864 = vadd.f32 %v790, %v844
      %v865 = vadd.f32 %v791, %v841
      %v866 = vadd.f32 %v792, %v842
      %v867 = vadd.f32 %v793, %v843
      %v868 = vadd.f32 %v794, %v844
      %v869 = vadd.f32 %v795, %v841
      %v870 = vadd.f32 %v796, %v842
      %v871 = vadd.f32 %v797, %v843
      %v872 = vadd.f32 %v798, %v844
      %v873 = vadd.f32 %v799, %v841
      %v874 = vadd.f32 %v800, %v842
      %v875 = vadd.f32 %v801, %v843
      %v876 = vadd.f32 %v802, %v844
      %v877 = vadd.f32 %v803, %v841
      %v878 = vadd.f32 %v804, %v842
      %v879 = vadd.f32 %v805, %v843
      %v880 = vadd.f32 %v806, %v844
      %v881 = vadd.f32 %v807, %v841
      %v882 = vadd.f32 %v808, %v842
      %v883 = vadd.f32 %v809, %v843
      %v884 = vadd.f32 %v810, %v844
      %v885 = vadd.f32 %v811, %v841
      %v886 = vadd.f32 %v812, %v842
      %v887 = vadd.f32 %v813, %v843
      %v888 = vadd.f32 %v814, %v844
      %v889 = vadd.f32 %v815, %v841
      %v890 = vadd.f32 %v816, %v842
      %v891 = vadd.f32 %v817, %v843
      %v892 = vadd.f32 %v818, %v844
      %v893 = vadd.f32 %v819, %v841
      %v894 = vadd.f32 %v820, %v842
      %v895 = vadd.f32 %v821, %v843
      %v896 = vadd.f32 %v822, %v844
      %v897 = vadd.f32 %v823, %v841
      %v898 = vadd.f32 %v824, %v842
      %v899 = vadd.f32 %v825, %v843
      %v900 = vadd.f32 %v826, %v844
      %v901 = vadd.f32 %v827, %v841
      %v902 = vadd.f32 %v828, %v842
      %v903 = vadd.f32 %v829, %v843
      %v904 = vadd.f32 %v830, %v844
      %v905 = vadd.f32 %v831, %v841
      %v906 = vadd.f32 %v832, %v842
      %v907 = vadd.f32 %v833, %v843
      %v908 = vadd.f32 %v834, %v844
      %v909 = vadd.f32 %v835, %v841
      %v910 = vadd.f32 %v836, %v842
      %v911 = vadd.f32 %v837, %v843
      %v912 = vadd.f32 %v838, %v844
      %913 = vst [vmem:[#allocation9] sm:$0xff] %v849
      %914 = vst [vmem:[#allocation9 + $0x8] sm:$0xff] %v850
      %915 = vst [vmem:[#allocation9 + $0x10] sm:$0xff] %v851
      %916 = vst [vmem:[#allocation9 + $0x18] sm:$0xff] %v852
      %917 = vst [vmem:[#allocation9 + $0x20] sm:$0xff] %v853
      %918 = vst [vmem:[#allocation9 + $0x28] sm:$0xff] %v854
      %919 = vst [vmem:[#allocation9 + $0x30] sm:$0xff] %v855
      %920 = vst [vmem:[#allocation9 + $0x38] sm:$0xff] %v856
      %921 = vst [vmem:[#allocation9 + $0x40] sm:$0xff] %v857
      %922 = vst [vmem:[#allocation9 + $0x48] sm:$0xff] %v858
      %923 = vst [vmem:[#allocation9 + $0x50] sm:$0xff] %v859
      %924 = vst [vmem:[#allocation9 + $0x58] sm:$0xff] %v860
      %925 = vst [vmem:[#allocation9 + $0x60] sm:$0xff] %v861
      %926 = vst [vmem:[#allocation9 + $0x68] sm:$0xff] %v862
      %927 = vst [vmem:[#allocation9 + $0x70] sm:$0xff] %v863
      %928 = vst [vmem:[#allocation9 + $0x78] sm:$0xff] %v864
      %929 = vst [vmem:[#allocation9 + $0x80] sm:$0xff] %v865
      %930 = vst [vmem:[#allocation9 + $0x88] sm:$0xff] %v866
      %931 = vst [vmem:[#allocation9 + $0x90] sm:$0xff] %v867
      %932 = vst [vmem:[#allocation9 + $0x98] sm:$0xff] %v868
      %933 = vst [vmem:[#allocation9 + $0xa0] sm:$0xff] %v869
      %934 = vst [vmem:[#allocation9 + $0xa8] sm:$0xff] %v870
      %935 = vst [vmem:[#allocation9 + $0xb0] sm:$0xff] %v871
      %936 = vst [vmem:[#allocation9 + $0xb8] sm:$0xff] %v872
      %937 = vst [vmem:[#allocation9 + $0xc0] sm:$0xff] %v873
      %938 = vst [vmem:[#allocation9 + $0xc8] sm:$0xff] %v874
      %939 = vst [vmem:[#allocation9 + $0xd0] sm:$0xff] %v875
      %940 = vst [vmem:[#allocation9 + $0xd8] sm:$0xff] %v876
      %941 = vst [vmem:[#allocation9 + $0xe0] sm:$0xff] %v877
      %942 = vst [vmem:[#allocation9 + $0xe8] sm:$0xff] %v878
      %943 = vst [vmem:[#allocation9 + $0xf0] sm:$0xff] %v879
      %944 = vst [vmem:[#allocation9 + $0xf8] sm:$0xff] %v880
      %945 = vst [vmem:[#allocation9 + $0x100] sm:$0xff] %v881
      %946 = vst [vmem:[#allocation9 + $0x108] sm:$0xff] %v882
      %947 = vst [vmem:[#allocation9 + $0x110] sm:$0xff] %v883
      %948 = vst [vmem:[#allocation9 + $0x118] sm:$0xff] %v884
      %949 = vst [vmem:[#allocation9 + $0x120] sm:$0xff] %v885
      %950 = vst [vmem:[#allocation9 + $0x128] sm:$0xff] %v886
      %951 = vst [vmem:[#allocation9 + $0x130] sm:$0xff] %v887
      %952 = vst [vmem:[#allocation9 + $0x138] sm:$0xff] %v888
      %953 = vst [vmem:[#allocation9 + $0x140] sm:$0xff] %v889
      %954 = vst [vmem:[#allocation9 + $0x148] sm:$0xff] %v890
      %955 = vst [vmem:[#allocation9 + $0x150] sm:$0xff] %v891
      %956 = vst [vmem:[#allocation9 + $0x158] sm:$0xff] %v892
      %957 = vst [vmem:[#allocation9 + $0x160] sm:$0xff] %v893
      %958 = vst [vmem:[#allocation9 + $0x168] sm:$0xff] %v894
      %959 = vst [vmem:[#allocation9 + $0x170] sm:$0xff] %v895
      %960 = vst [vmem:[#allocation9 + $0x178] sm:$0xff] %v896
      %961 = vst [vmem:[#allocation9 + $0x180] sm:$0xff] %v897
      %962 = vst [vmem:[#allocation9 + $0x188] sm:$0xff] %v898
      %963 = vst [vmem:[#allocation9 + $0x190] sm:$0xff] %v899
      %964 = vst [vmem:[#allocation9 + $0x198] sm:$0xff] %v900
      %965 = vst [vmem:[#allocation9 + $0x1a0] sm:$0xff] %v901
      %966 = vst [vmem:[#allocation9 + $0x1a8] sm:$0xff] %v902
      %967 = vst [vmem:[#allocation9 + $0x1b0] sm:$0xff] %v903
      %968 = vst [vmem:[#allocation9 + $0x1b8] sm:$0xff] %v904
      %969 = vst [vmem:[#allocation9 + $0x1c0] sm:$0xff] %v905
      %970 = vst [vmem:[#allocation9 + $0x1c8] sm:$0xff] %v906
      %971 = vst [vmem:[#allocation9 + $0x1d0] sm:$0xff] %v907
      %972 = vst [vmem:[#allocation9 + $0x1d8] sm:$0xff] %v908
      %973 = vst [vmem:[#allocation9 + $0x1e0] sm:$0xff] %v909
      %974 = vst [vmem:[#allocation9 + $0x1e8] sm:$0xff] %v910
      %975 = vst [vmem:[#allocation9 + $0x1f0] sm:$0xff] %v911
      %976 = vst [vmem:[#allocation9 + $0x1f8] sm:$0xff] %v912
    $region33: #{tpu_custom_call.1} parent=1 // pred_fallthru
      _
    // Predicated region
    $region34: #{tpu_custom_call.1} parent=1 // pred_check
      _
    $region35: #{tpu_custom_call.1} parent=1 // pred_check_branch
      %978 = sbr.rel (0) target = $region37
    $region36: #{tpu_custom_call.1} parent=1 // pred_region
      %980 = vsyncadd [#allocation5], 0
      %s981 = sshll.u32 [#allocation9], 4
      %s982 = int_to_ptr.vmem [resolvable:$true] %s981
      %s983 = sshll.u32 %s3, 4
      %s984 = int_to_ptr.hbm [resolvable:$true] %s983
      %989 = dma.vmem_to_hbm [thread:$0]  %s982, 8192, %s984, [#allocation5], 512, 512, 32
    $region37: #{tpu_custom_call.1} parent=1 // pred_fallthru
      _
    // Predicated region
    $region38: #{tpu_custom_call.1} parent=1 // pred_check
      _
    $region39: #{tpu_custom_call.1} parent=1 // pred_check_branch
      %991 = sbr.rel (0) target = $region41
    $region40: #{tpu_custom_call.1} parent=1 // pred_region
      %993 = dma.done [#allocation5], 8192
    $region41: #{tpu_custom_call.1} parent=1 // pred_fallthru
      _
    %994 = vsyncpa [#allocation4], 1
    %995 = vsyncpa [#allocation7], 1
    %996 = vsyncpa [#allocation5], 1

</llo_original>
